<compile_context>
chip_gen: v6e
topology: v6e:2x2x1
jax: 0.10.0
libtpu: 0.0.40
codegen_flags: <defaults>
</compile_context>

<pallas_src>
import functools
import math

import jax
import jax.numpy as jnp
from jax.experimental import pallas as pl
from jax.experimental.pallas import tpu as pltpu


def _rmsnorm_kernel(x_ref, w_ref, o_ref, *, eps, inv_hidden):
    # x_ref: (tile_rows, hidden), w_ref: (1, hidden), o_ref: like x_ref.
    x = x_ref[...].astype(jnp.float32)                       # x.float()
    norm = jnp.sum(x * x, axis=-1, keepdims=True) * inv_hidden  # mean over last dim
    xnorm = x * jax.lax.rsqrt(norm + eps)                    # x * rsqrt(norm + eps)
    xnorm = xnorm.astype(o_ref.dtype)                        # .to(dtype)  (PyTorch parity)
    o_ref[...] = xnorm * w_ref[...].astype(o_ref.dtype)      # * weight


def _round_up(a: int, b: int) -> int:
    return (a + b - 1) // b * b


def _tpu_params():
    """(per-TensorCore VMEM capacity bytes, TensorCores per chip) — best effort."""
    vmem_cap = 64 << 20   # conservative fallback (v7x-sized per-TC VMEM)
    num_cores = 1         # conservative fallback (v5e/v6e: 1 TC per chip)
    try:
        info = pltpu.get_tpu_info()
        vmem_cap = int(getattr(info, "vmem_capacity_bytes", vmem_cap))
        for attr in ("num_tensorcores", "tensorcore_count", "num_cores", "core_count"):
            v = getattr(info, attr, None)
            if isinstance(v, int) and v > 0:
                num_cores = v
                break
    except Exception:
        pass
    return vmem_cap, num_cores


def _plan_tiles(rows: int, hidden: int, itemsize: int):
    """Pick (tile_rows, vmem_limit_bytes) from the per-TensorCore VMEM budget."""
    # Sublane packing per dtype: 8 rows (f32), 16 (bf16/f16), 32 (int8/fp8).
    sublane = 8 * max(1, 4 // itemsize)

    vmem_cap, num_cores = _tpu_params()

    # Explicit scoped-VMEM limit: defaults (16/32 MiB) are far below physical.
    # Leave ~24 MiB headroom for compiler scratch; never ask above ~100 MiB.
    vmem_limit = max(32 << 20, min(vmem_cap - (24 << 20), 100 << 20))

    # Per-row VMEM cost:
    #   double-buffered input + output tiles (native dtype)
    #   + single-buffered f32 intermediates (x upcast + xnorm) inside the body.
    hidden_p = _round_up(hidden, 128)  # Mosaic lane padding, for budgeting only
    bytes_per_row = (2 * 2 * hidden_p * itemsize) + (8 * hidden_p)
    budget = int(vmem_limit * 0.6)
    tile = max(sublane, (budget // bytes_per_row) // sublane * sublane)

    # Streaming kernels reach ~85% of HBM roofline by 512-1024 rows; bigger
    # tiles only burn VMEM headroom (critical on 64 MiB parts).
    tile = min(tile, 1024)

    # Never allocate a block (much) larger than the data itself.
    tile = min(tile, _round_up(max(rows, 1), sublane))

    # Multi-TensorCore chips (v7x): keep >= ~4 grid steps so the "parallel"
    # axis shards across both cores with warm pipelines. On single-TC chips the
    # grid is a sequential loop, so splitting is pure overhead — skip it.
    if num_cores > 1:
        tile = min(tile, max(sublane, _round_up(pl.cdiv(rows, 4), sublane)))

    return tile, vmem_limit


def rmsnorm(x, weight, eps: float = 1e-6, tile_rows=None):
    """RMSNorm over the last axis of `x`, elementwise-scaled by `weight`."""
    orig_shape = x.shape
    hidden = orig_shape[-1]
    rows = math.prod(orig_shape[:-1]) if len(orig_shape) > 1 else 1
    itemsize = jnp.dtype(x.dtype).itemsize
    sublane = 8 * max(1, 4 // itemsize)

    auto_tile, vmem_limit = _plan_tiles(rows, hidden, itemsize)
    if tile_rows is None:
        tile_rows = auto_tile
    else:
        tile_rows = max(sublane, _round_up(int(tile_rows), sublane))

    # No padding / slicing: the hidden block spans the full last dim (legal for
    # any hidden), and a partial last row-block is handled by Pallas (reads
    # past the end are ignored per-row, writes past the end are dropped).
    x2d = x.reshape(rows, hidden)
    # NOTE: weight is applied in x.dtype (matches the module when activations
    # and weight are both fp32, the default use_nGPT==0 path).
    w2d = weight.astype(x.dtype).reshape(1, hidden)

    kernel = functools.partial(_rmsnorm_kernel, eps=eps, inv_hidden=1.0 / hidden)

    out2d = pl.pallas_call(
        kernel,
        out_shape=jax.ShapeDtypeStruct((rows, hidden), x.dtype),
        grid_spec=pltpu.PrefetchScalarGridSpec(
            num_scalar_prefetch=0,
            grid=(pl.cdiv(rows, tile_rows),),
            in_specs=[
                pl.BlockSpec((tile_rows, hidden), lambda i: (i, 0)),
                pl.BlockSpec((1, hidden), lambda i: (0, 0)),
            ],
            out_specs=pl.BlockSpec((tile_rows, hidden), lambda i: (i, 0)),
        ),
        compiler_params=pltpu.CompilerParams(
            dimension_semantics=("parallel",),
            vmem_limit_bytes=int(vmem_limit),
        ),
    )(x2d, w2d)

    return out2d.reshape(orig_shape)


def _ref_rmsnorm(x, w, eps):
    xf = x.astype(jnp.float32)
    norm = jnp.mean(xf * xf, axis=-1, keepdims=True)
    xnorm = (xf * jax.lax.rsqrt(norm + eps)).astype(x.dtype)
    return xnorm * w.astype(x.dtype)


if __name__ == "__main__":
    key = jax.random.PRNGKey(0)
    k1, k2 = jax.random.split(key)
    eps = 1e-6

    # Shapes consistent with the module's final norm: (batch, seq, n_embd).
    batch, seq, hidden = 2, 8, 32
    x = jax.random.normal(k1, (batch, seq, hidden), dtype=jnp.float32)
    weight = jnp.ones((hidden,), dtype=jnp.float32)  # RMSNorm weight init = ones

    out = jax.block_until_ready(rmsnorm(x, weight, eps=eps))
    ref = _ref_rmsnorm(x, weight, eps)
    assert out.shape == x.shape and out.dtype == x.dtype
    assert jnp.allclose(out, ref, atol=1e-5, rtol=1e-5)

    # Second check: lane-dense hidden (multiple of 128), bf16 dtype, odd row
    # count — exercises the partial-last-block path and bf16 sublane packing.
    x2 = jax.random.normal(k2, (3, 7, 128), dtype=jnp.float32).astype(jnp.bfloat16)
    w2 = 1.0 + 0.01 * jnp.arange(128, dtype=jnp.float32)
    out2 = jax.block_until_ready(rmsnorm(x2, w2, eps=eps))
    ref2 = _ref_rmsnorm(x2, w2, eps)
    assert out2.shape == x2.shape and out2.dtype == x2.dtype
    assert jnp.allclose(out2.astype(jnp.float32), ref2.astype(jnp.float32),
                        atol=2e-2, rtol=2e-2)

    # Third check: explicit small tile so multiple grid steps (incl. a partial
    # final block) are exercised even on single-TC chips.
    x3 = jax.random.normal(k1, (5, 9, 32), dtype=jnp.float32)
    out3 = jax.block_until_ready(rmsnorm(x3, weight, eps=eps, tile_rows=8))
    ref3 = _ref_rmsnorm(x3, weight, eps)
    assert jnp.allclose(out3, ref3, atol=1e-5, rtol=1e-5)

    # TODO(synk): the rest of LinearEnsembleNGPT (embedding, ensemble-attention
    # blocks, lm_head) is left to standard JAX; this kernel covers the RMSNorm
    # final-norm path (use_nGPT == 0). Ideally this norm is fused into the
    # lm_head matmul prologue to remove one full HBM read+write of the
    # activations entirely.
    print("KERNEL_OK")
</pallas_src>

<mosaic_0001>
module attributes {stable_mosaic.version = 11 : i64} {
  func.func @_rmsnorm_kernel(%arg0: i32, %arg1: memref<16x32xf32, #tpu.memory_space<vmem>>, %arg2: memref<1x32xf32, #tpu.memory_space<vmem>>, %arg3: memref<16x32xf32, #tpu.memory_space<vmem>>) attributes {dimension_semantics = [#tpu.dimension_semantics<parallel>], iteration_bounds = array<i64: 1>, scalar_prefetch = 0 : i64, scratch_operands = 0 : i64, tpu.core_type = #tpu.core_type<tc>, window_params = [{transform_indices = @transform_0, window_bounds = array<i64: 16, 32>}, {pipeline_mode = #tpu.pipeline_mode<synchronous>, transform_indices = @transform_1, window_bounds = array<i64: 1, 32>}, {transform_indices = @transform_2, window_bounds = array<i64: 16, 32>}]} {
    %c0 = arith.constant 0 : index
    %c0_0 = arith.constant 0 : index
    %0 = vector.load %arg1[%c0, %c0_0] : memref<16x32xf32, #tpu.memory_space<vmem>>, vector<16x32xf32>
    %1 = arith.mulf %0, %0 : vector<16x32xf32>
    %cst = arith.constant dense<0.000000e+00> : vector<16xf32>
    %2 = vector.multi_reduction <add>, %1, %cst [1] : vector<16x32xf32> to vector<16xf32>
    %3 = vector.shape_cast %2 : vector<16xf32> to vector<16x1xf32>
    %cst_1 = arith.constant 3.125000e-02 : f32
    %4 = vector.broadcast %cst_1 : f32 to vector<16x1xf32>
    %5 = arith.mulf %3, %4 : vector<16x1xf32>
    %cst_2 = arith.constant 9.99999997E-7 : f32
    %6 = vector.broadcast %cst_2 : f32 to vector<16x1xf32>
    %7 = arith.addf %5, %6 : vector<16x1xf32>
    %8 = math.rsqrt %7 : vector<16x1xf32>
    %9 = vector.broadcast %8 : vector<16x1xf32> to vector<16x32xf32>
    %10 = arith.mulf %0, %9 : vector<16x32xf32>
    %c0_3 = arith.constant 0 : index
    %c0_4 = arith.constant 0 : index
    %11 = vector.load %arg2[%c0_3, %c0_4] : memref<1x32xf32, #tpu.memory_space<vmem>>, vector<1x32xf32>
    %12 = vector.broadcast %11 : vector<1x32xf32> to vector<16x32xf32>
    %13 = arith.mulf %10, %12 : vector<16x32xf32>
    %c0_5 = arith.constant 0 : index
    %c0_6 = arith.constant 0 : index
    %14 = vector.load %arg3[%c0_5, %c0_6] : memref<16x32xf32, #tpu.memory_space<vmem>>, vector<16x32xf32>
    tpu.vector_store %arg3[%c0_5, %c0_6], %13 {strides = array<i32>} : memref<16x32xf32, #tpu.memory_space<vmem>>, vector<16x32xf32>,
    return
  }
  func.func @transform_0(%arg0: i32) -> (i32, i32) {
    %c0_i32 = arith.constant 0 : i32
    %c0_i32_0 = arith.constant 0 : i32
    return %arg0, %c0_i32 : i32, i32
  }
  func.func @transform_1(%arg0: i32) -> (i32, i32) {
    %c0_i32 = arith.constant 0 : i32
    %c0_i32_0 = arith.constant 0 : i32
    %c0_i32_1 = arith.constant 0 : i32
    return %c0_i32, %c0_i32_0 : i32, i32
  }
  func.func @transform_2(%arg0: i32) -> (i32, i32) {
    %c0_i32 = arith.constant 0 : i32
    %c0_i32_0 = arith.constant 0 : i32
    return %arg0, %c0_i32 : i32, i32
  }
}

</mosaic_0001>

<llo_original>
// kernel: tpu_custom_call.1
$region0: #{tpu_custom_call.1}
  #allocation0 [shape = 'u32[]', space=smem, size = 0x4, offset = 0x4, fixed_abs, tag = 'smem constant byte address 0x4 - core index']
  #allocation1 [shape = 'u32[144,128]{1,0:T(1,128)}', space=vmem, size = 0x12000, scoped, tag = 'internal scratch']
  %s0 = inlined_call_operand.hbm [shape: f32[16,32], index: 0, kind: input, shape index: {}]
  %s1 = inlined_call_operand.vmem [shape: f32[1,32], index: 1, kind: input, shape index: {}]
  %s2 = inlined_call_operand.hbm [shape: f32[16,32], index: 2, kind: output, shape index: {}]
  %s3 = sld [smem:[#allocation0]]
  $region22: #{tpu_custom_call.1} parent=0
    _
  %s5 = ssub.s32 1, %s3
  %s6 = scalar_select 0, %s5, %s3
  $region1: #{tpu_custom_call.1} parent=0
    #allocation2 [shape = 'u8[8192]{0}', space=vmem, size = 0x2000, scoped, tag = 'input window, operand 0, single buffered']
    #allocation3 [shape = 's32[1]{0}', space=sflag, size = 0x4, scoped, tag = 'scoped memory for tpu_custom_call.1']
    #allocation4 [shape = 's32[1]{0}', space=sflag, size = 0x4, scoped, tag = 'scoped memory for tpu_custom_call.1']
    #allocation5 [shape = 'u8[8192]{0}', space=vmem, size = 0x2000, scoped, tag = 'output window, operand 0, single buffered']
    %7 = vsyncpa [#allocation3], 0
    %8 = vsyncpa [#allocation4], 0
    // Predicated region
    $region2: #{tpu_custom_call.1} parent=1 // pred_check
      _
    $region3: #{tpu_custom_call.1} parent=1 // pred_check_branch
      %10 = sbr.rel (0) target = $region5
    $region4: #{tpu_custom_call.1} parent=1 // pred_region
      %s12 = ssub.s32 256, 256
      %13 = vsyncadd [#allocation3], %s12
      %s14 = sshll.u32 [#allocation2], 4
      %s15 = int_to_ptr.vmem [resolvable:$true] %s14
      %20 = dma.hbm_to_vmem [thread:$0]  %s0, 256, %s15, [#allocation3], 128, 128, 8
    $region5: #{tpu_custom_call.1} parent=1 // pred_fallthru
      _
    // Predicated region
    $region6: #{tpu_custom_call.1} parent=1 // pred_check
      _
    $region7: #{tpu_custom_call.1} parent=1 // pred_check_branch
      %22 = sbr.rel (0) target = $region9
    $region8: #{tpu_custom_call.1} parent=1 // pred_region
      _
    $region9: #{tpu_custom_call.1} parent=1 // pred_fallthru
      _
    // Predicated region
    $region10: #{tpu_custom_call.1} parent=1 // pred_check
      _
    $region11: #{tpu_custom_call.1} parent=1 // pred_check_branch
      %24 = sbr.rel (0) target = $region13
    $region12: #{tpu_custom_call.1} parent=1 // pred_region
      %25 = dma.done [#allocation3], 256
    $region13: #{tpu_custom_call.1} parent=1 // pred_fallthru
      _
    %v26 = vld [vmem:[#allocation2] sm:$0xff]
    %v27 = vld [vmem:[#allocation2 + $0x8] sm:$0xff]
    %v28 = vmul.f32 %v26, %v26
    %v29 = vmul.f32 %v27, %v27
    %vm30 = vcmask 261120
    %v31 = vsel %vm30, %v28, 0.0
    %32 = vadd.xlane.f32.xlu0 %v31
    %v33 = vpop.xlane.xlu0 %32
    %v34 = vsel %vm30, %v29, 0.0
    %35 = vadd.xlane.f32.xlu0 %v34
    %v36 = vpop.xlane.xlu0 %35
    %v37 = vmul.f32 %v33, 0.03125
    %v38 = vmul.f32 %v36, 0.03125
    %v39 = vadd.f32 %v37, 1e-06
    %v40 = vadd.f32 %v38, 1e-06
    %v41 = vrsqrt.pop %v39
    %v42 = vrsqrt.pop %v40
    %v43 = vmul.f32 %v26, %v41
    %v44 = vmul.f32 %v27, %v42
    %v45 = vld [vmem:[%s1] sm:$0x1]
    %v47 = vlaneseq
    %v48 = vshrl.u32 %v47, 7
    %v49 = vsub.s32 0, %v48
    %v50 = vrot.slane %v45, %v49
    %v52 = vmul.f32 %v43, %v50
    %v53 = vmul.f32 %v44, %v50
    %54 = vst.msk [vmem:[#allocation5] sm:$0xff] %vm30, %v52
    %55 = vst.msk [vmem:[#allocation5 + $0x8] sm:$0xff] %vm30, %v53
    // Predicated region
    $region14: #{tpu_custom_call.1} parent=1 // pred_check
      _
    $region15: #{tpu_custom_call.1} parent=1 // pred_check_branch
      %57 = sbr.rel (0) target = $region17
    $region16: #{tpu_custom_call.1} parent=1 // pred_region
      %s59 = ssub.s32 256, 256
      %60 = vsyncadd [#allocation4], %s59
      %s61 = sshll.u32 [#allocation5], 4
      %s62 = int_to_ptr.vmem [resolvable:$true] %s61
      %67 = dma.vmem_to_hbm [thread:$0]  %s62, 256, %s2, [#allocation4], 128, 128, 8
    $region17: #{tpu_custom_call.1} parent=1 // pred_fallthru
      _
    // Predicated region
    $region18: #{tpu_custom_call.1} parent=1 // pred_check
      _
    $region19: #{tpu_custom_call.1} parent=1 // pred_check_branch
      %69 = sbr.rel (0) target = $region21
    $region20: #{tpu_custom_call.1} parent=1 // pred_region
      %70 = dma.done [#allocation4], 256
    $region21: #{tpu_custom_call.1} parent=1 // pred_fallthru
      _
    %71 = vsyncpa [#allocation3], 1
    %72 = vsyncpa [#allocation4], 1

</llo_original>
